<compile_context>
chip_gen: v5e
topology: v5e:2x2
jax: 0.10.0
libtpu: 0.0.40
codegen_flags: <defaults>
</compile_context>

<pallas_src>
import functools

import jax
import jax.numpy as jnp
from jax.experimental import pallas as pl
from jax.experimental.pallas import tpu as pltpu

IN_DIM = 128 + 128 + 128   # 384
H1 = 256
H2 = 128
OUT_DIM = 2
OUT_PAD = 8                # padded output rows in the transposed (8, B) layout


def _mlp_kernel(x_ref, w1_ref, b1_ref, w2_ref, b2_ref, w3t_ref, b3t_ref, o_ref):
    # x stays f32 in HBM; cast to the matmul dtype in-kernel (free on idle VPU
    # slots, no extra HBM pass).  Biases and accumulation stay f32.
    x = x_ref[...].astype(w1_ref.dtype)
    h1 = jnp.dot(x, w1_ref[...], preferred_element_type=jnp.float32) + b1_ref[...]
    h1 = jnp.maximum(h1, 0.0)
    h2 = jnp.dot(h1.astype(w2_ref.dtype), w2_ref[...],
                 preferred_element_type=jnp.float32) + b2_ref[...]
    h2 = jnp.maximum(h2, 0.0)
    # Transposed last layer: (8,128) @ (128, bb) -> (8, bb).  The (bb,128) ->
    # (128, bb) transpose rides the otherwise-idle XLU; the store is 8 sublanes
    # of bb dense lanes (32 B/row) instead of a bb x 128 mostly-zero f32 slab.
    h2t = h2.T.astype(w3t_ref.dtype)
    out_t = jnp.dot(w3t_ref[...], h2t,
                    preferred_element_type=jnp.float32) + b3t_ref[...]
    o_ref[...] = out_t.astype(o_ref.dtype)


def _fused_mlp_call(xs, prepared, bb):
    """Runs the fused MLP over the first (xs.shape[0] // bb) * bb rows of xs.

    Returns the transposed output of shape (OUT_PAD, n*bb), float32.
    """
    w1, b1, w2, b2, w3t, b3t = prepared
    n = xs.shape[0] // bb
    rows = n * bb

    flops = 2 * rows * (IN_DIM * H1 + H1 * H2 + H2 * OUT_PAD)
    bytes_accessed = (
        rows * IN_DIM * xs.dtype.itemsize
        + sum(a.size * a.dtype.itemsize for a in prepared)
        + OUT_PAD * rows * 4
    )

    const = lambda i: (0, 0)   # weights/biases: same block every step -> VMEM-resident

    return pl.pallas_call(
        _mlp_kernel,
        out_shape=jax.ShapeDtypeStruct((OUT_PAD, rows), jnp.float32),
        grid_spec=pltpu.PrefetchScalarGridSpec(
            num_scalar_prefetch=0,
            grid=(n,),
            in_specs=[
                pl.BlockSpec((bb, IN_DIM), lambda i: (i, 0)),   # x tile
                pl.BlockSpec((IN_DIM, H1), const),              # w1
                pl.BlockSpec((1, H1), const),                   # b1
                pl.BlockSpec((H1, H2), const),                  # w2
                pl.BlockSpec((1, H2), const),                   # b2
                pl.BlockSpec((OUT_PAD, H2), const),             # w3^T (padded to 8 rows)
                pl.BlockSpec((OUT_PAD, 1), const),              # b3^T (padded)
            ],
            out_specs=pl.BlockSpec((OUT_PAD, bb), lambda i: (0, i)),
        ),
        compiler_params=pltpu.CompilerParams(
            dimension_semantics=("parallel",),
            vmem_limit_bytes=32 * 1024 * 1024,
        ),
        cost_estimate=pl.CostEstimate(
            flops=flops, transcendentals=0, bytes_accessed=bytes_accessed),
    )(xs, w1, b1, w2, b2, w3t, b3t)


def _pick_block(B, block_b):
    """Effective row-tile: multiple of 128, capped for VMEM, >=2 steps when possible."""
    bb = min(int(block_b), 4096)              # v7x VMEM cap (~24 MiB worst case @4096)
    bb = max(128, (bb // 128) * 128)
    if B >= 256:
        # Keep at least 2 grid steps so v7x's two TensorCores both get work.
        half = max(128, ((B // 2) // 128) * 128)
        bb = min(bb, half)
    else:
        bb = 128
    return bb


@functools.partial(jax.jit, static_argnames=("block_b",))
def decoder_model_forward(x, prepared_params, block_b=2048):
    """x: [B, 384] float32, prepared_params from prepare_params() -> [B, 2] float32."""
    B = x.shape[0]
    bb = _pick_block(B, block_b)

    n_main = B // bb
    b_main = n_main * bb
    outs = []

    if n_main > 0:
        # Reads only the first b_main rows of x in place (no full-array pad/copy).
        outs.append(_fused_mlp_call(x, prepared_params, bb))

    rem = B - b_main
    if rem > 0:
        # Ragged tail: pad only the remainder slice up to one small 128-row tile.
        bb_tail = 128 * pl.cdiv(rem, 128)
        x_tail = x[b_main:]
        if bb_tail != rem:
            x_tail = jnp.pad(x_tail, ((0, bb_tail - rem), (0, 0)))
        outs.append(_fused_mlp_call(x_tail, prepared_params, bb_tail))

    out_t = outs[0] if len(outs) == 1 else jnp.concatenate(outs, axis=1)
    # Strip the lane padding (tail rows) and the 8-row output padding; transpose back.
    return out_t[:OUT_DIM, :B].T


def prepare_params(params, use_bf16=True):
    """One-time parameter prep (outside the per-call path):
    - last layer stored transposed and padded to 8 output rows: w3^T (8,128), b3^T (8,1)
    - matmul weights optionally cast to bf16 (default: yes — required for v5e MXU,
      free on v6e/v7x); biases stay f32."""
    w1, b1, w2, b2, w3, b3 = params
    mm_dtype = jnp.bfloat16 if use_bf16 else jnp.float32
    w3t = jnp.zeros((OUT_PAD, H2), jnp.float32).at[:OUT_DIM, :].set(w3.T)
    b3t = jnp.zeros((OUT_PAD, 1), jnp.float32).at[:OUT_DIM, 0].set(b3.reshape(-1))
    return (
        w1.astype(mm_dtype),
        b1.reshape(1, H1).astype(jnp.float32),
        w2.astype(mm_dtype),
        b2.reshape(1, H2).astype(jnp.float32),
        w3t.astype(mm_dtype),
        b3t,
    )


def init_params(key):
    """Deterministic init mimicking PyTorch nn.Linear defaults
    (uniform(-1/sqrt(fan_in), 1/sqrt(fan_in)) for weight and bias).
    Weights are stored transposed as [in, out]."""
    def linear(k, fan_in, fan_out):
        kw, kb = jax.random.split(k)
        bound = 1.0 / jnp.sqrt(fan_in)
        w = jax.random.uniform(kw, (fan_in, fan_out), jnp.float32, -bound, bound)
        b = jax.random.uniform(kb, (1, fan_out), jnp.float32, -bound, bound)
        return w, b

    k1, k2, k3 = jax.random.split(key, 3)
    w1, b1 = linear(k1, IN_DIM, H1)
    w2, b2 = linear(k2, H1, H2)
    w3, b3 = linear(k3, H2, OUT_DIM)
    return (w1, b1, w2, b2, w3, b3)


def reference_forward(x, params):
    w1, b1, w2, b2, w3, b3 = params
    h1 = jnp.maximum(x @ w1 + b1, 0.0)
    h2 = jnp.maximum(h1 @ w2 + b2, 0.0)
    return h2 @ w3 + b3


if __name__ == "__main__":
    key = jax.random.PRNGKey(0)
    kp, kx = jax.random.split(key)
    params = init_params(kp)

    # Small batch: exercises the tail-only path (padded to one 128-row tile).
    batch = 8
    x = jax.random.normal(kx, (batch, IN_DIM), jnp.float32)
    ref = reference_forward(x, params)

    # f32 matmul path (tight tolerance).
    pp_f32 = prepare_params(params, use_bf16=False)
    out_f32 = jax.block_until_ready(decoder_model_forward(x, pp_f32))
    assert out_f32.shape == (batch, OUT_DIM)
    assert jnp.allclose(out_f32, ref, atol=1e-4, rtol=1e-4), "f32 mismatch vs reference"

    # bf16 matmul-input path (default; cast happens in-kernel, looser tolerance).
    pp_bf16 = prepare_params(params, use_bf16=True)
    out_bf16 = jax.block_until_ready(decoder_model_forward(x, pp_bf16))
    assert out_bf16.shape == (batch, OUT_DIM)
    assert jnp.allclose(out_bf16, ref, atol=5e-2, rtol=5e-2), "bf16 mismatch vs reference"

    # Larger batch: exercises the 2-step parallel main grid + ragged-tail path.
    batch2 = 260
    x2 = jax.random.normal(kx, (batch2, IN_DIM), jnp.float32)
    ref2 = reference_forward(x2, params)
    out2 = jax.block_until_ready(decoder_model_forward(x2, pp_f32))
    assert out2.shape == (batch2, OUT_DIM)
    assert jnp.allclose(out2, ref2, atol=1e-4, rtol=1e-4), "ragged-batch mismatch vs reference"

    print("KERNEL_OK")
</pallas_src>

<mosaic_0001>
module attributes {stable_mosaic.version = 11 : i64} {
  func.func @_mlp_kernel(%arg0: i32, %arg1: memref<128x384xf32, #tpu.memory_space<vmem>>, %arg2: memref<384x256xf32, #tpu.memory_space<vmem>>, %arg3: memref<1x256xf32, #tpu.memory_space<vmem>>, %arg4: memref<256x128xf32, #tpu.memory_space<vmem>>, %arg5: memref<1x128xf32, #tpu.memory_space<vmem>>, %arg6: memref<8x128xf32, #tpu.memory_space<vmem>>, %arg7: memref<8x1xf32, #tpu.memory_space<vmem>>, %arg8: memref<8x128xf32, #tpu.memory_space<vmem>>) attributes {dimension_semantics = [#tpu.dimension_semantics<parallel>], iteration_bounds = array<i64: 1>, scalar_prefetch = 0 : i64, scratch_operands = 0 : i64, tpu.core_type = #tpu.core_type<tc>, window_params = [{transform_indices = @transform_0, window_bounds = array<i64: 128, 384>}, {pipeline_mode = #tpu.pipeline_mode<synchronous>, transform_indices = @transform_1, window_bounds = array<i64: 384, 256>}, {pipeline_mode = #tpu.pipeline_mode<synchronous>, transform_indices = @transform_2, window_bounds = array<i64: 1, 256>}, {pipeline_mode = #tpu.pipeline_mode<synchronous>, transform_indices = @transform_3, window_bounds = array<i64: 256, 128>}, {pipeline_mode = #tpu.pipeline_mode<synchronous>, transform_indices = @transform_4, window_bounds = array<i64: 1, 128>}, {pipeline_mode = #tpu.pipeline_mode<synchronous>, transform_indices = @transform_5, window_bounds = array<i64: 8, 128>}, {pipeline_mode = #tpu.pipeline_mode<synchronous>, transform_indices = @transform_6, window_bounds = array<i64: 8, 1>}, {transform_indices = @transform_7, window_bounds = array<i64: 8, 128>}]} {
    %c0 = arith.constant 0 : index
    %c0_0 = arith.constant 0 : index
    %0 = vector.load %arg1[%c0, %c0_0] : memref<128x384xf32, #tpu.memory_space<vmem>>, vector<128x384xf32>
    %c0_1 = arith.constant 0 : index
    %c0_2 = arith.constant 0 : index
    %1 = vector.load %arg2[%c0_1, %c0_2] : memref<384x256xf32, #tpu.memory_space<vmem>>, vector<384x256xf32>
    %cst = arith.constant dense<0.000000e+00> : vector<128x256xf32>
    %2 = tpu.matmul %0, %1, %cst {dimension_numbers = #tpu.dot_dimension_numbers<[1], [0], [0], [1], [0, 0, 1, 1], [], []>} : vector<128x384xf32>, vector<384x256xf32>, vector<128x256xf32> -> vector<128x256xf32>
    %c0_3 = arith.constant 0 : index
    %c0_4 = arith.constant 0 : index
    %3 = vector.load %arg3[%c0_3, %c0_4] : memref<1x256xf32, #tpu.memory_space<vmem>>, vector<1x256xf32>
    %4 = vector.broadcast %3 : vector<1x256xf32> to vector<128x256xf32>
    %5 = arith.addf %2, %4 : vector<128x256xf32>
    %cst_5 = arith.constant 0.000000e+00 : f32
    %6 = vector.broadcast %cst_5 : f32 to vector<128x256xf32>
    %7 = arith.maximumf %5, %6 : vector<128x256xf32>
    %c0_6 = arith.constant 0 : index
    %c0_7 = arith.constant 0 : index
    %8 = vector.load %arg4[%c0_6, %c0_7] : memref<256x128xf32, #tpu.memory_space<vmem>>, vector<256x128xf32>
    %cst_8 = arith.constant dense<0.000000e+00> : vector<128x128xf32>
    %9 = tpu.matmul %7, %8, %cst_8 {dimension_numbers = #tpu.dot_dimension_numbers<[1], [0], [0], [1], [0, 0, 1, 1], [], []>} : vector<128x256xf32>, vector<256x128xf32>, vector<128x128xf32> -> vector<128x128xf32>
    %c0_9 = arith.constant 0 : index
    %c0_10 = arith.constant 0 : index
    %10 = vector.load %arg5[%c0_9, %c0_10] : memref<1x128xf32, #tpu.memory_space<vmem>>, vector<1x128xf32>
    %11 = vector.broadcast %10 : vector<1x128xf32> to vector<128x128xf32>
    %12 = arith.addf %9, %11 : vector<128x128xf32>
    %cst_11 = arith.constant 0.000000e+00 : f32
    %13 = vector.broadcast %cst_11 : f32 to vector<128x128xf32>
    %14 = arith.maximumf %12, %13 : vector<128x128xf32>
    %15 = tpu.transpose %14, [1, 0] : vector<128x128xf32> -> vector<128x128xf32>
    %c0_12 = arith.constant 0 : index
    %c0_13 = arith.constant 0 : index
    %16 = vector.load %arg6[%c0_12, %c0_13] : memref<8x128xf32, #tpu.memory_space<vmem>>, vector<8x128xf32>
    %cst_14 = arith.constant dense<0.000000e+00> : vector<8x128xf32>
    %17 = tpu.matmul %16, %15, %cst_14 {dimension_numbers = #tpu.dot_dimension_numbers<[1], [0], [0], [1], [0, 0, 1, 1], [], []>} : vector<8x128xf32>, vector<128x128xf32>, vector<8x128xf32> -> vector<8x128xf32>
    %c0_15 = arith.constant 0 : index
    %c0_16 = arith.constant 0 : index
    %18 = vector.load %arg7[%c0_15, %c0_16] : memref<8x1xf32, #tpu.memory_space<vmem>>, vector<8x1xf32>
    %19 = vector.broadcast %18 : vector<8x1xf32> to vector<8x128xf32>
    %20 = arith.addf %17, %19 : vector<8x128xf32>
    %c0_17 = arith.constant 0 : index
    %c0_18 = arith.constant 0 : index
    %21 = vector.load %arg8[%c0_17, %c0_18] : memref<8x128xf32, #tpu.memory_space<vmem>>, vector<8x128xf32>
    tpu.vector_store %arg8[%c0_17, %c0_18], %20 {strides = array<i32>} : memref<8x128xf32, #tpu.memory_space<vmem>>, vector<8x128xf32>,
    return
  }
  func.func @transform_0(%arg0: i32) -> (i32, i32) {
    %c0_i32 = arith.constant 0 : i32
    %c0_i32_0 = arith.constant 0 : i32
    return %arg0, %c0_i32 : i32, i32
  }
  func.func @transform_1(%arg0: i32) -> (i32, i32) {
    %c0_i32 = arith.constant 0 : i32
    %c0_i32_0 = arith.constant 0 : i32
    %c0_i32_1 = arith.constant 0 : i32
    return %c0_i32, %c0_i32_0 : i32, i32
  }
  func.func @transform_2(%arg0: i32) -> (i32, i32) {
    %c0_i32 = arith.constant 0 : i32
    %c0_i32_0 = arith.constant 0 : i32
    %c0_i32_1 = arith.constant 0 : i32
    return %c0_i32, %c0_i32_0 : i32, i32
  }
  func.func @transform_3(%arg0: i32) -> (i32, i32) {
    %c0_i32 = arith.constant 0 : i32
    %c0_i32_0 = arith.constant 0 : i32
    %c0_i32_1 = arith.constant 0 : i32
    return %c0_i32, %c0_i32_0 : i32, i32
  }
  func.func @transform_4(%arg0: i32) -> (i32, i32) {
    %c0_i32 = arith.constant 0 : i32
    %c0_i32_0 = arith.constant 0 : i32
    %c0_i32_1 = arith.constant 0 : i32
    return %c0_i32, %c0_i32_0 : i32, i32
  }
  func.func @transform_5(%arg0: i32) -> (i32, i32) {
    %c0_i32 = arith.constant 0 : i32
    %c0_i32_0 = arith.constant 0 : i32
    %c0_i32_1 = arith.constant 0 : i32
    return %c0_i32, %c0_i32_0 : i32, i32
  }
  func.func @transform_6(%arg0: i32) -> (i32, i32) {
    %c0_i32 = arith.constant 0 : i32
    %c0_i32_0 = arith.constant 0 : i32
    %c0_i32_1 = arith.constant 0 : i32
    return %c0_i32, %c0_i32_0 : i32, i32
  }
  func.func @transform_7(%arg0: i32) -> (i32, i32) {
    %c0_i32 = arith.constant 0 : i32
    %c0_i32_0 = arith.constant 0 : i32
    return %c0_i32, %arg0 : i32, i32
  }
}

</mosaic_0001>

<llo_original>
// kernel: decoder_model_forward.1
$region0: #{decoder_model_forward.1}
  #allocation0 [shape = 'u32[]', space=smem, size = 0x4, offset = 0x4, fixed_abs, tag = 'smem constant byte address 0x4 - core index']
  #allocation1 [shape = 'u32[72,128]{1,0:T(1,128)}', space=vmem, size = 0x9000, scoped, tag = 'internal scratch']
  %s0 = inlined_call_operand.vmem [shape: f32[128,384], index: 0, kind: input, shape index: {}]
  %s1 = inlined_call_operand.hbm [shape: f32[384,256], index: 1, kind: input, shape index: {}]
  %s2 = inlined_call_operand.vmem [shape: f32[1,256], index: 2, kind: input, shape index: {}]
  %s3 = inlined_call_operand.vmem [shape: f32[256,128], index: 3, kind: input, shape index: {}]
  %s4 = inlined_call_operand.vmem [shape: f32[1,128], index: 4, kind: input, shape index: {}]
  %s5 = inlined_call_operand.vmem [shape: f32[8,128], index: 5, kind: input, shape index: {}]
  %s6 = inlined_call_operand.vmem [shape: f32[8,1], index: 6, kind: input, shape index: {}]
  %s7 = inlined_call_operand.vmem [shape: f32[8,128], index: 7, kind: output, shape index: {}]
  %s8 = sld [smem:[#allocation0]]
  $region42: #{decoder_model_forward.1} parent=0
    _
  %s10 = ssub.s32 1, %s8
  %s11 = scalar_select 0, %s10, %s8
  $region1: #{decoder_model_forward.1} parent=0
    #allocation2 [shape = 'u8[393216]{0}', space=vmem, size = 0x60000, scoped, tag = 'input window, operand 1, single buffered']
    #allocation3 [shape = 's32[1]{0}', space=sflag, size = 0x4, scoped, tag = 'scoped memory for decoder_model_forward.1']
    %12 = vsyncpa [#allocation3], 0
    // Predicated region
    $region2: #{decoder_model_forward.1} parent=1 // pred_check
      _
    $region3: #{decoder_model_forward.1} parent=1 // pred_check_branch
      %14 = sbr.rel (0) target = $region5
    $region4: #{decoder_model_forward.1} parent=1 // pred_region
      _
    $region5: #{decoder_model_forward.1} parent=1 // pred_fallthru
      _
    // Predicated region
    $region6: #{decoder_model_forward.1} parent=1 // pred_check
      _
    $region7: #{decoder_model_forward.1} parent=1 // pred_check_branch
      %16 = sbr.rel (0) target = $region9
    $region8: #{decoder_model_forward.1} parent=1 // pred_region
      %18 = vsyncadd [#allocation3], 0
      %s19 = sshll.u32 %s1, 4
      %s20 = int_to_ptr.hbm [resolvable:$true] %s19
      %s21 = sshll.u32 [#allocation2], 4
      %s22 = int_to_ptr.vmem [resolvable:$true] %s21
      %27 = dma.hbm_to_vmem [thread:$0]  %s20, 12288, %s22, [#allocation3], 256, 256, 16
    $region9: #{decoder_model_forward.1} parent=1 // pred_fallthru
      _
    // Predicated region
    $region10: #{decoder_model_forward.1} parent=1 // pred_check
      _
    $region11: #{decoder_model_forward.1} parent=1 // pred_check_branch
      %29 = sbr.rel (0) target = $region13
    $region12: #{decoder_model_forward.1} parent=1 // pred_region
      _
    $region13: #{decoder_model_forward.1} parent=1 // pred_fallthru
      _
    // Predicated region
    $region14: #{decoder_model_forward.1} parent=1 // pred_check
      _
    $region15: #{decoder_model_forward.1} parent=1 // pred_check_branch
      %31 = sbr.rel (0) target = $region17
    $region16: #{decoder_model_forward.1} parent=1 // pred_region
      _
    $region17: #{decoder_model_forward.1} parent=1 // pred_fallthru
      _
    // Predicated region
    $region18: #{decoder_model_forward.1} parent=1 // pred_check
      _
    $region19: #{decoder_model_forward.1} parent=1 // pred_check_branch
      %33 = sbr.rel (0) target = $region21
    $region20: #{decoder_model_forward.1} parent=1 // pred_region
      _
    $region21: #{decoder_model_forward.1} parent=1 // pred_fallthru
      _
    // Predicated region
    $region22: #{decoder_model_forward.1} parent=1 // pred_check
      _
    $region23: #{decoder_model_forward.1} parent=1 // pred_check_branch
      %35 = sbr.rel (0) target = $region25
    $region24: #{decoder_model_forward.1} parent=1 // pred_region
      _
    $region25: #{decoder_model_forward.1} parent=1 // pred_fallthru
      _
    // Predicated region
    $region26: #{decoder_model_forward.1} parent=1 // pred_check
      _
    $region27: #{decoder_model_forward.1} parent=1 // pred_check_branch
      %37 = sbr.rel (0) target = $region29
    $region28: #{decoder_model_forward.1} parent=1 // pred_region
      _
    $region29: #{decoder_model_forward.1} parent=1 // pred_fallthru
      _
    // Predicated region
    $region30: #{decoder_model_forward.1} parent=1 // pred_check
      _
    $region31: #{decoder_model_forward.1} parent=1 // pred_check_branch
      %39 = sbr.rel (0) target = $region33
    $region32: #{decoder_model_forward.1} parent=1 // pred_region
      %41 = dma.done [#allocation3], 12288
    $region33: #{decoder_model_forward.1} parent=1 // pred_fallthru
      _
    %v42 = vld [vmem:[%s0] sm:$0xff]
    %v43 = vld [vmem:[%s0 + $0x8] sm:$0xff]
    %v44 = vld [vmem:[%s0 + $0x10] sm:$0xff]
    %v45 = vld [vmem:[%s0 + $0x18] sm:$0xff]
    %v46 = vld [vmem:[%s0 + $0x20] sm:$0xff]
    %v47 = vld [vmem:[%s0 + $0x28] sm:$0xff]
    %v48 = vld [vmem:[%s0 + $0x30] sm:$0xff]
    %v49 = vld [vmem:[%s0 + $0x38] sm:$0xff]
    %v50 = vld [vmem:[%s0 + $0x40] sm:$0xff]
    %v51 = vld [vmem:[%s0 + $0x48] sm:$0xff]
    %v52 = vld [vmem:[%s0 + $0x50] sm:$0xff]
    %v53 = vld [vmem:[%s0 + $0x58] sm:$0xff]
    %v54 = vld [vmem:[%s0 + $0x60] sm:$0xff]
    %v55 = vld [vmem:[%s0 + $0x68] sm:$0xff]
    %v56 = vld [vmem:[%s0 + $0x70] sm:$0xff]
    %v57 = vld [vmem:[%s0 + $0x78] sm:$0xff]
    %v58 = vld [vmem:[%s0 + $0x80] sm:$0xff]
    %v59 = vld [vmem:[%s0 + $0x88] sm:$0xff]
    %v60 = vld [vmem:[%s0 + $0x90] sm:$0xff]
    %v61 = vld [vmem:[%s0 + $0x98] sm:$0xff]
    %v62 = vld [vmem:[%s0 + $0xa0] sm:$0xff]
    %v63 = vld [vmem:[%s0 + $0xa8] sm:$0xff]
    %v64 = vld [vmem:[%s0 + $0xb0] sm:$0xff]
    %v65 = vld [vmem:[%s0 + $0xb8] sm:$0xff]
    %v66 = vld [vmem:[%s0 + $0xc0] sm:$0xff]
    %v67 = vld [vmem:[%s0 + $0xc8] sm:$0xff]
    %v68 = vld [vmem:[%s0 + $0xd0] sm:$0xff]
    %v69 = vld [vmem:[%s0 + $0xd8] sm:$0xff]
    %v70 = vld [vmem:[%s0 + $0xe0] sm:$0xff]
    %v71 = vld [vmem:[%s0 + $0xe8] sm:$0xff]
    %v72 = vld [vmem:[%s0 + $0xf0] sm:$0xff]
    %v73 = vld [vmem:[%s0 + $0xf8] sm:$0xff]
    %v74 = vld [vmem:[%s0 + $0x100] sm:$0xff]
    %v75 = vld [vmem:[%s0 + $0x108] sm:$0xff]
    %v76 = vld [vmem:[%s0 + $0x110] sm:$0xff]
    %v77 = vld [vmem:[%s0 + $0x118] sm:$0xff]
    %v78 = vld [vmem:[%s0 + $0x120] sm:$0xff]
    %v79 = vld [vmem:[%s0 + $0x128] sm:$0xff]
    %v80 = vld [vmem:[%s0 + $0x130] sm:$0xff]
    %v81 = vld [vmem:[%s0 + $0x138] sm:$0xff]
    %v82 = vld [vmem:[%s0 + $0x140] sm:$0xff]
    %v83 = vld [vmem:[%s0 + $0x148] sm:$0xff]
    %v84 = vld [vmem:[%s0 + $0x150] sm:$0xff]
    %v85 = vld [vmem:[%s0 + $0x158] sm:$0xff]
    %v86 = vld [vmem:[%s0 + $0x160] sm:$0xff]
    %v87 = vld [vmem:[%s0 + $0x168] sm:$0xff]
    %v88 = vld [vmem:[%s0 + $0x170] sm:$0xff]
    %v89 = vld [vmem:[%s0 + $0x178] sm:$0xff]
    %v90 = vld [vmem:[#allocation2] sm:$0xff]
    %v91 = vld [vmem:[#allocation2 + $0x8] sm:$0xff]
    %v92 = vld [vmem:[#allocation2 + $0x10] sm:$0xff]
    %v93 = vld [vmem:[#allocation2 + $0x18] sm:$0xff]
    %v94 = vld [vmem:[#allocation2 + $0x20] sm:$0xff]
    %v95 = vld [vmem:[#allocation2 + $0x28] sm:$0xff]
    %v96 = vld [vmem:[#allocation2 + $0x30] sm:$0xff]
    %v97 = vld [vmem:[#allocation2 + $0x38] sm:$0xff]
    %v98 = vld [vmem:[#allocation2 + $0x40] sm:$0xff]
    %v99 = vld [vmem:[#allocation2 + $0x48] sm:$0xff]
    %v100 = vld [vmem:[#allocation2 + $0x50] sm:$0xff]
    %v101 = vld [vmem:[#allocation2 + $0x58] sm:$0xff]
    %v102 = vld [vmem:[#allocation2 + $0x60] sm:$0xff]
    %v103 = vld [vmem:[#allocation2 + $0x68] sm:$0xff]
    %v104 = vld [vmem:[#allocation2 + $0x70] sm:$0xff]
    %v105 = vld [vmem:[#allocation2 + $0x78] sm:$0xff]
    %v106 = vld [vmem:[#allocation2 + $0x80] sm:$0xff]
    %v107 = vld [vmem:[#allocation2 + $0x88] sm:$0xff]
    %v108 = vld [vmem:[#allocation2 + $0x90] sm:$0xff]
    %v109 = vld [vmem:[#allocation2 + $0x98] sm:$0xff]
    %v110 = vld [vmem:[#allocation2 + $0xa0] sm:$0xff]
    %v111 = vld [vmem:[#allocation2 + $0xa8] sm:$0xff]
    %v112 = vld [vmem:[#allocation2 + $0xb0] sm:$0xff]
    %v113 = vld [vmem:[#allocation2 + $0xb8] sm:$0xff]
    %v114 = vld [vmem:[#allocation2 + $0xc0] sm:$0xff]
    %v115 = vld [vmem:[#allocation2 + $0xc8] sm:$0xff]
    %v116 = vld [vmem:[#allocation2 + $0xd0] sm:$0xff]
    %v117 = vld [vmem:[#allocation2 + $0xd8] sm:$0xff]
    %v118 = vld [vmem:[#allocation2 + $0xe0] sm:$0xff]
    %v119 = vld [vmem:[#allocation2 + $0xe8] sm:$0xff]
    %v120 = vld [vmem:[#allocation2 + $0xf0] sm:$0xff]
    %v121 = vld [vmem:[#allocation2 + $0xf8] sm:$0xff]
    %v122 = vld [vmem:[#allocation2 + $0x100] sm:$0xff]
    %v123 = vld [vmem:[#allocation2 + $0x108] sm:$0xff]
    %v124 = vld [vmem:[#allocation2 + $0x110] sm:$0xff]
    %v125 = vld [vmem:[#allocation2 + $0x118] sm:$0xff]
    %v126 = vld [vmem:[#allocation2 + $0x120] sm:$0xff]
    %v127 = vld [vmem:[#allocation2 + $0x128] sm:$0xff]
    %v128 = vld [vmem:[#allocation2 + $0x130] sm:$0xff]
    %v129 = vld [vmem:[#allocation2 + $0x138] sm:$0xff]
    %v130 = vld [vmem:[#allocation2 + $0x140] sm:$0xff]
    %v131 = vld [vmem:[#allocation2 + $0x148] sm:$0xff]
    %v132 = vld [vmem:[#allocation2 + $0x150] sm:$0xff]
    %v133 = vld [vmem:[#allocation2 + $0x158] sm:$0xff]
    %v134 = vld [vmem:[#allocation2 + $0x160] sm:$0xff]
    %v135 = vld [vmem:[#allocation2 + $0x168] sm:$0xff]
    %v136 = vld [vmem:[#allocation2 + $0x170] sm:$0xff]
    %v137 = vld [vmem:[#allocation2 + $0x178] sm:$0xff]
    %v138 = vld [vmem:[#allocation2 + $0x180] sm:$0xff]
    %v139 = vld [vmem:[#allocation2 + $0x188] sm:$0xff]
    %v140 = vld [vmem:[#allocation2 + $0x190] sm:$0xff]
    %v141 = vld [vmem:[#allocation2 + $0x198] sm:$0xff]
    %v142 = vld [vmem:[#allocation2 + $0x1a0] sm:$0xff]
    %v143 = vld [vmem:[#allocation2 + $0x1a8] sm:$0xff]
    %v144 = vld [vmem:[#allocation2 + $0x1b0] sm:$0xff]
    %v145 = vld [vmem:[#allocation2 + $0x1b8] sm:$0xff]
    %v146 = vld [vmem:[#allocation2 + $0x1c0] sm:$0xff]
    %v147 = vld [vmem:[#allocation2 + $0x1c8] sm:$0xff]
    %v148 = vld [vmem:[#allocation2 + $0x1d0] sm:$0xff]
    %v149 = vld [vmem:[#allocation2 + $0x1d8] sm:$0xff]
    %v150 = vld [vmem:[#allocation2 + $0x1e0] sm:$0xff]
    %v151 = vld [vmem:[#allocation2 + $0x1e8] sm:$0xff]
    %v152 = vld [vmem:[#allocation2 + $0x1f0] sm:$0xff]
    %v153 = vld [vmem:[#allocation2 + $0x1f8] sm:$0xff]
    %v154 = vld [vmem:[#allocation2 + $0x200] sm:$0xff]
    %v155 = vld [vmem:[#allocation2 + $0x208] sm:$0xff]
    %v156 = vld [vmem:[#allocation2 + $0x210] sm:$0xff]
    %v157 = vld [vmem:[#allocation2 + $0x218] sm:$0xff]
    %v158 = vld [vmem:[#allocation2 + $0x220] sm:$0xff]
    %v159 = vld [vmem:[#allocation2 + $0x228] sm:$0xff]
    %v160 = vld [vmem:[#allocation2 + $0x230] sm:$0xff]
    %v161 = vld [vmem:[#allocation2 + $0x238] sm:$0xff]
    %v162 = vld [vmem:[#allocation2 + $0x240] sm:$0xff]
    %v163 = vld [vmem:[#allocation2 + $0x248] sm:$0xff]
    %v164 = vld [vmem:[#allocation2 + $0x250] sm:$0xff]
    %v165 = vld [vmem:[#allocation2 + $0x258] sm:$0xff]
    %v166 = vld [vmem:[#allocation2 + $0x260] sm:$0xff]
    %v167 = vld [vmem:[#allocation2 + $0x268] sm:$0xff]
    %v168 = vld [vmem:[#allocation2 + $0x270] sm:$0xff]
    %v169 = vld [vmem:[#allocation2 + $0x278] sm:$0xff]
    %v170 = vld [vmem:[#allocation2 + $0x280] sm:$0xff]
    %v171 = vld [vmem:[#allocation2 + $0x288] sm:$0xff]
    %v172 = vld [vmem:[#allocation2 + $0x290] sm:$0xff]
    %v173 = vld [vmem:[#allocation2 + $0x298] sm:$0xff]
    %v174 = vld [vmem:[#allocation2 + $0x2a0] sm:$0xff]
    %v175 = vld [vmem:[#allocation2 + $0x2a8] sm:$0xff]
    %v176 = vld [vmem:[#allocation2 + $0x2b0] sm:$0xff]
    %v177 = vld [vmem:[#allocation2 + $0x2b8] sm:$0xff]
    %v178 = vld [vmem:[#allocation2 + $0x2c0] sm:$0xff]
    %v179 = vld [vmem:[#allocation2 + $0x2c8] sm:$0xff]
    %v180 = vld [vmem:[#allocation2 + $0x2d0] sm:$0xff]
    %v181 = vld [vmem:[#allocation2 + $0x2d8] sm:$0xff]
    %v182 = vld [vmem:[#allocation2 + $0x2e0] sm:$0xff]
    %v183 = vld [vmem:[#allocation2 + $0x2e8] sm:$0xff]
    %v184 = vld [vmem:[#allocation2 + $0x2f0] sm:$0xff]
    %v185 = vld [vmem:[#allocation2 + $0x2f8] sm:$0xff]
    %v186 = vld [vmem:[%s2] sm:$0x3]
    %v188 = vperm.slane %v186, 0
    %v189 = vperm.slane %v186, 1
    %192 = vmatpush.msra.mxu0 %v120
    %193 = vmatpush.msra.mxu0 %v118
    %194 = vmatpush.msra.mxu0 %v116
    %195 = vmatpush.msra.mxu0 %v114
    %196 = vmatpush.msra.mxu0 %v112
    %197 = vmatpush.msra.mxu0 %v110
    %198 = vmatpush.msra.mxu0 %v108
    %199 = vmatpush.msra.mxu0 %v106
    %200 = vmatpush.msra.mxu0 %v104
    %201 = vmatpush.msra.mxu0 %v102
    %202 = vmatpush.msra.mxu0 %v100
    %203 = vmatpush.msra.mxu0 %v98
    %204 = vmatpush.msra.mxu0 %v96
    %205 = vmatpush.msra.mxu0 %v94
    %206 = vmatpush.msra.mxu0 %v92
    %207 = vmatpush.msra.mxu0 %v90
    %208 = vmatmul.f32.gmra.mxu0 %v42
    %v209 = vpop.f32.mrf.mxu0
    %v210 = vadd.f32 %v188, %v209
    %211 = vmatmul.f32.gmra.mxu0 %v45
    %v212 = vpop.f32.mrf.mxu0
    %v213 = vadd.f32 %v188, %v212
    %214 = vmatmul.f32.gmra.mxu0 %v48
    %v215 = vpop.f32.mrf.mxu0
    %v216 = vadd.f32 %v188, %v215
    %217 = vmatmul.f32.gmra.mxu0 %v51
    %v218 = vpop.f32.mrf.mxu0
    %v219 = vadd.f32 %v188, %v218
    %220 = vmatmul.f32.gmra.mxu0 %v54
    %v221 = vpop.f32.mrf.mxu0
    %v222 = vadd.f32 %v188, %v221
    %223 = vmatmul.f32.gmra.mxu0 %v57
    %v224 = vpop.f32.mrf.mxu0
    %v225 = vadd.f32 %v188, %v224
    %226 = vmatmul.f32.gmra.mxu0 %v60
    %v227 = vpop.f32.mrf.mxu0
    %v228 = vadd.f32 %v188, %v227
    %229 = vmatmul.f32.gmra.mxu0 %v63
    %v230 = vpop.f32.mrf.mxu0
    %v231 = vadd.f32 %v188, %v230
    %232 = vmatmul.f32.gmra.mxu0 %v66
    %v233 = vpop.f32.mrf.mxu0
    %v234 = vadd.f32 %v188, %v233
    %235 = vmatmul.f32.gmra.mxu0 %v69
    %v236 = vpop.f32.mrf.mxu0
    %v237 = vadd.f32 %v188, %v236
    %238 = vmatmul.f32.gmra.mxu0 %v72
    %v239 = vpop.f32.mrf.mxu0
    %v240 = vadd.f32 %v188, %v239
    %241 = vmatmul.f32.gmra.mxu0 %v75
    %v242 = vpop.f32.mrf.mxu0
    %v243 = vadd.f32 %v188, %v242
    %244 = vmatmul.f32.gmra.mxu0 %v78
    %v245 = vpop.f32.mrf.mxu0
    %v246 = vadd.f32 %v188, %v245
    %247 = vmatmul.f32.gmra.mxu0 %v81
    %v248 = vpop.f32.mrf.mxu0
    %v249 = vadd.f32 %v188, %v248
    %250 = vmatmul.f32.gmra.mxu0 %v84
    %v251 = vpop.f32.mrf.mxu0
    %v252 = vadd.f32 %v188, %v251
    %253 = vmatmul.f32.gmra.mxu0 %v87
    %v254 = vpop.f32.mrf.mxu0
    %v255 = vadd.f32 %v188, %v254
    %256 = vdwg.mxu0
    %257 = vmatpush.msra.mxu0 %v152
    %258 = vmatpush.msra.mxu0 %v150
    %259 = vmatpush.msra.mxu0 %v148
    %260 = vmatpush.msra.mxu0 %v146
    %261 = vmatpush.msra.mxu0 %v144
    %262 = vmatpush.msra.mxu0 %v142
    %263 = vmatpush.msra.mxu0 %v140
    %264 = vmatpush.msra.mxu0 %v138
    %265 = vmatpush.msra.mxu0 %v136
    %266 = vmatpush.msra.mxu0 %v134
    %267 = vmatpush.msra.mxu0 %v132
    %268 = vmatpush.msra.mxu0 %v130
    %269 = vmatpush.msra.mxu0 %v128
    %270 = vmatpush.msra.mxu0 %v126
    %271 = vmatpush.msra.mxu0 %v124
    %272 = vmatpush.msra.mxu0 %v122
    %273 = vmatmul.f32.gmra.mxu0 %v43
    %v274 = vpop.f32.mrf.mxu0
    %v275 = vadd.f32 %v210, %v274
    %276 = vmatmul.f32.gmra.mxu0 %v46
    %v277 = vpop.f32.mrf.mxu0
    %v278 = vadd.f32 %v213, %v277
    %279 = vmatmul.f32.gmra.mxu0 %v49
    %v280 = vpop.f32.mrf.mxu0
    %v281 = vadd.f32 %v216, %v280
    %282 = vmatmul.f32.gmra.mxu0 %v52
    %v283 = vpop.f32.mrf.mxu0
    %v284 = vadd.f32 %v219, %v283
    %285 = vmatmul.f32.gmra.mxu0 %v55
    %v286 = vpop.f32.mrf.mxu0
    %v287 = vadd.f32 %v222, %v286
    %288 = vmatmul.f32.gmra.mxu0 %v58
    %v289 = vpop.f32.mrf.mxu0
    %v290 = vadd.f32 %v225, %v289
    %291 = vmatmul.f32.gmra.mxu0 %v61
    %v292 = vpop.f32.mrf.mxu0
    %v293 = vadd.f32 %v228, %v292
    %294 = vmatmul.f32.gmra.mxu0 %v64
    %v295 = vpop.f32.mrf.mxu0
    %v296 = vadd.f32 %v231, %v295
    %297 = vmatmul.f32.gmra.mxu0 %v67
    %v298 = vpop.f32.mrf.mxu0
    %v299 = vadd.f32 %v234, %v298
    %300 = vmatmul.f32.gmra.mxu0 %v70
    %v301 = vpop.f32.mrf.mxu0
    %v302 = vadd.f32 %v237, %v301
    %303 = vmatmul.f32.gmra.mxu0 %v73
    %v304 = vpop.f32.mrf.mxu0
    %v305 = vadd.f32 %v240, %v304
    %306 = vmatmul.f32.gmra.mxu0 %v76
    %v307 = vpop.f32.mrf.mxu0
    %v308 = vadd.f32 %v243, %v307
    %309 = vmatmul.f32.gmra.mxu0 %v79
    %v310 = vpop.f32.mrf.mxu0
    %v311 = vadd.f32 %v246, %v310
    %312 = vmatmul.f32.gmra.mxu0 %v82
    %v313 = vpop.f32.mrf.mxu0
    %v314 = vadd.f32 %v249, %v313
    %315 = vmatmul.f32.gmra.mxu0 %v85
    %v316 = vpop.f32.mrf.mxu0
    %v317 = vadd.f32 %v252, %v316
    %318 = vmatmul.f32.gmra.mxu0 %v88
    %v319 = vpop.f32.mrf.mxu0
    %v320 = vadd.f32 %v255, %v319
    %321 = vdwg.mxu0
    %322 = vmatpush.msra.mxu0 %v184
    %323 = vmatpush.msra.mxu0 %v182
    %324 = vmatpush.msra.mxu0 %v180
    %325 = vmatpush.msra.mxu0 %v178
    %326 = vmatpush.msra.mxu0 %v176
    %327 = vmatpush.msra.mxu0 %v174
    %328 = vmatpush.msra.mxu0 %v172
    %329 = vmatpush.msra.mxu0 %v170
    %330 = vmatpush.msra.mxu0 %v168
    %331 = vmatpush.msra.mxu0 %v166
    %332 = vmatpush.msra.mxu0 %v164
    %333 = vmatpush.msra.mxu0 %v162
    %334 = vmatpush.msra.mxu0 %v160
    %335 = vmatpush.msra.mxu0 %v158
    %336 = vmatpush.msra.mxu0 %v156
    %337 = vmatpush.msra.mxu0 %v154
    %338 = vmatmul.f32.gmra.mxu0 %v44
    %v339 = vpop.f32.mrf.mxu0
    %v340 = vadd.f32 %v275, %v339
    %341 = vmatmul.f32.gmra.mxu0 %v47
    %v342 = vpop.f32.mrf.mxu0
    %v343 = vadd.f32 %v278, %v342
    %344 = vmatmul.f32.gmra.mxu0 %v50
    %v345 = vpop.f32.mrf.mxu0
    %v346 = vadd.f32 %v281, %v345
    %347 = vmatmul.f32.gmra.mxu0 %v53
    %v348 = vpop.f32.mrf.mxu0
    %v349 = vadd.f32 %v284, %v348
    %350 = vmatmul.f32.gmra.mxu0 %v56
    %v351 = vpop.f32.mrf.mxu0
    %v352 = vadd.f32 %v287, %v351
    %353 = vmatmul.f32.gmra.mxu0 %v59
    %v354 = vpop.f32.mrf.mxu0
    %v355 = vadd.f32 %v290, %v354
    %356 = vmatmul.f32.gmra.mxu0 %v62
    %v357 = vpop.f32.mrf.mxu0
    %v358 = vadd.f32 %v293, %v357
    %359 = vmatmul.f32.gmra.mxu0 %v65
    %v360 = vpop.f32.mrf.mxu0
    %v361 = vadd.f32 %v296, %v360
    %362 = vmatmul.f32.gmra.mxu0 %v68
    %v363 = vpop.f32.mrf.mxu0
    %v364 = vadd.f32 %v299, %v363
    %365 = vmatmul.f32.gmra.mxu0 %v71
    %v366 = vpop.f32.mrf.mxu0
    %v367 = vadd.f32 %v302, %v366
    %368 = vmatmul.f32.gmra.mxu0 %v74
    %v369 = vpop.f32.mrf.mxu0
    %v370 = vadd.f32 %v305, %v369
    %371 = vmatmul.f32.gmra.mxu0 %v77
    %v372 = vpop.f32.mrf.mxu0
    %v373 = vadd.f32 %v308, %v372
    %374 = vmatmul.f32.gmra.mxu0 %v80
    %v375 = vpop.f32.mrf.mxu0
    %v376 = vadd.f32 %v311, %v375
    %377 = vmatmul.f32.gmra.mxu0 %v83
    %v378 = vpop.f32.mrf.mxu0
    %v379 = vadd.f32 %v314, %v378
    %380 = vmatmul.f32.gmra.mxu0 %v86
    %v381 = vpop.f32.mrf.mxu0
    %v382 = vadd.f32 %v317, %v381
    %383 = vmatmul.f32.gmra.mxu0 %v89
    %v384 = vpop.f32.mrf.mxu0
    %v385 = vadd.f32 %v320, %v384
    %386 = vdwg.mxu0
    %387 = vmatpush.msra.mxu0 %v121
    %388 = vmatpush.msra.mxu0 %v119
    %389 = vmatpush.msra.mxu0 %v117
    %390 = vmatpush.msra.mxu0 %v115
    %391 = vmatpush.msra.mxu0 %v113
    %392 = vmatpush.msra.mxu0 %v111
    %393 = vmatpush.msra.mxu0 %v109
    %394 = vmatpush.msra.mxu0 %v107
    %395 = vmatpush.msra.mxu0 %v105
    %396 = vmatpush.msra.mxu0 %v103
    %397 = vmatpush.msra.mxu0 %v101
    %398 = vmatpush.msra.mxu0 %v99
    %399 = vmatpush.msra.mxu0 %v97
    %400 = vmatpush.msra.mxu0 %v95
    %401 = vmatpush.msra.mxu0 %v93
    %402 = vmatpush.msra.mxu0 %v91
    %403 = vmatmul.f32.gmra.mxu0 %v42
    %v404 = vpop.f32.mrf.mxu0
    %v405 = vadd.f32 %v189, %v404
    %406 = vmatmul.f32.gmra.mxu0 %v45
    %v407 = vpop.f32.mrf.mxu0
    %v408 = vadd.f32 %v189, %v407
    %409 = vmatmul.f32.gmra.mxu0 %v48
    %v410 = vpop.f32.mrf.mxu0
    %v411 = vadd.f32 %v189, %v410
    %412 = vmatmul.f32.gmra.mxu0 %v51
    %v413 = vpop.f32.mrf.mxu0
    %v414 = vadd.f32 %v189, %v413
    %415 = vmatmul.f32.gmra.mxu0 %v54
    %v416 = vpop.f32.mrf.mxu0
    %v417 = vadd.f32 %v189, %v416
    %418 = vmatmul.f32.gmra.mxu0 %v57
    %v419 = vpop.f32.mrf.mxu0
    %v420 = vadd.f32 %v189, %v419
    %421 = vmatmul.f32.gmra.mxu0 %v60
    %v422 = vpop.f32.mrf.mxu0
    %v423 = vadd.f32 %v189, %v422
    %424 = vmatmul.f32.gmra.mxu0 %v63
    %v425 = vpop.f32.mrf.mxu0
    %v426 = vadd.f32 %v189, %v425
    %427 = vmatmul.f32.gmra.mxu0 %v66
    %v428 = vpop.f32.mrf.mxu0
    %v429 = vadd.f32 %v189, %v428
    %430 = vmatmul.f32.gmra.mxu0 %v69
    %v431 = vpop.f32.mrf.mxu0
    %v432 = vadd.f32 %v189, %v431
    %433 = vmatmul.f32.gmra.mxu0 %v72
    %v434 = vpop.f32.mrf.mxu0
    %v435 = vadd.f32 %v189, %v434
    %436 = vmatmul.f32.gmra.mxu0 %v75
    %v437 = vpop.f32.mrf.mxu0
    %v438 = vadd.f32 %v189, %v437
    %439 = vmatmul.f32.gmra.mxu0 %v78
    %v440 = vpop.f32.mrf.mxu0
    %v441 = vadd.f32 %v189, %v440
    %442 = vmatmul.f32.gmra.mxu0 %v81
    %v443 = vpop.f32.mrf.mxu0
    %v444 = vadd.f32 %v189, %v443
    %445 = vmatmul.f32.gmra.mxu0 %v84
    %v446 = vpop.f32.mrf.mxu0
    %v447 = vadd.f32 %v189, %v446
    %448 = vmatmul.f32.gmra.mxu0 %v87
    %v449 = vpop.f32.mrf.mxu0
    %v450 = vadd.f32 %v189, %v449
    %451 = vdwg.mxu0
    %452 = vmatpush.msra.mxu0 %v153
    %453 = vmatpush.msra.mxu0 %v151
    %454 = vmatpush.msra.mxu0 %v149
    %455 = vmatpush.msra.mxu0 %v147
    %456 = vmatpush.msra.mxu0 %v145
    %457 = vmatpush.msra.mxu0 %v143
    %458 = vmatpush.msra.mxu0 %v141
    %459 = vmatpush.msra.mxu0 %v139
    %460 = vmatpush.msra.mxu0 %v137
    %461 = vmatpush.msra.mxu0 %v135
    %462 = vmatpush.msra.mxu0 %v133
    %463 = vmatpush.msra.mxu0 %v131
    %464 = vmatpush.msra.mxu0 %v129
    %465 = vmatpush.msra.mxu0 %v127
    %466 = vmatpush.msra.mxu0 %v125
    %467 = vmatpush.msra.mxu0 %v123
    %468 = vmatmul.f32.gmra.mxu0 %v43
    %v469 = vpop.f32.mrf.mxu0
    %v470 = vadd.f32 %v405, %v469
    %471 = vmatmul.f32.gmra.mxu0 %v46
    %v472 = vpop.f32.mrf.mxu0
    %v473 = vadd.f32 %v408, %v472
    %474 = vmatmul.f32.gmra.mxu0 %v49
    %v475 = vpop.f32.mrf.mxu0
    %v476 = vadd.f32 %v411, %v475
    %477 = vmatmul.f32.gmra.mxu0 %v52
    %v478 = vpop.f32.mrf.mxu0
    %v479 = vadd.f32 %v414, %v478
    %480 = vmatmul.f32.gmra.mxu0 %v55
    %v481 = vpop.f32.mrf.mxu0
    %v482 = vadd.f32 %v417, %v481
    %483 = vmatmul.f32.gmra.mxu0 %v58
    %v484 = vpop.f32.mrf.mxu0
    %v485 = vadd.f32 %v420, %v484
    %486 = vmatmul.f32.gmra.mxu0 %v61
    %v487 = vpop.f32.mrf.mxu0
    %v488 = vadd.f32 %v423, %v487
    %489 = vmatmul.f32.gmra.mxu0 %v64
    %v490 = vpop.f32.mrf.mxu0
    %v491 = vadd.f32 %v426, %v490
    %492 = vmatmul.f32.gmra.mxu0 %v67
    %v493 = vpop.f32.mrf.mxu0
    %v494 = vadd.f32 %v429, %v493
    %495 = vmatmul.f32.gmra.mxu0 %v70
    %v496 = vpop.f32.mrf.mxu0
    %v497 = vadd.f32 %v432, %v496
    %498 = vmatmul.f32.gmra.mxu0 %v73
    %v499 = vpop.f32.mrf.mxu0
    %v500 = vadd.f32 %v435, %v499
    %501 = vmatmul.f32.gmra.mxu0 %v76
    %v502 = vpop.f32.mrf.mxu0
    %v503 = vadd.f32 %v438, %v502
    %504 = vmatmul.f32.gmra.mxu0 %v79
    %v505 = vpop.f32.mrf.mxu0
    %v506 = vadd.f32 %v441, %v505
    %507 = vmatmul.f32.gmra.mxu0 %v82
    %v508 = vpop.f32.mrf.mxu0
    %v509 = vadd.f32 %v444, %v508
    %510 = vmatmul.f32.gmra.mxu0 %v85
    %v511 = vpop.f32.mrf.mxu0
    %v512 = vadd.f32 %v447, %v511
    %513 = vmatmul.f32.gmra.mxu0 %v88
    %v514 = vpop.f32.mrf.mxu0
    %v515 = vadd.f32 %v450, %v514
    %516 = vdwg.mxu0
    %517 = vmatpush.msra.mxu0 %v185
    %518 = vmatpush.msra.mxu0 %v183
    %519 = vmatpush.msra.mxu0 %v181
    %520 = vmatpush.msra.mxu0 %v179
    %521 = vmatpush.msra.mxu0 %v177
    %522 = vmatpush.msra.mxu0 %v175
    %523 = vmatpush.msra.mxu0 %v173
    %524 = vmatpush.msra.mxu0 %v171
    %525 = vmatpush.msra.mxu0 %v169
    %526 = vmatpush.msra.mxu0 %v167
    %527 = vmatpush.msra.mxu0 %v165
    %528 = vmatpush.msra.mxu0 %v163
    %529 = vmatpush.msra.mxu0 %v161
    %530 = vmatpush.msra.mxu0 %v159
    %531 = vmatpush.msra.mxu0 %v157
    %532 = vmatpush.msra.mxu0 %v155
    %533 = vmatmul.f32.gmra.mxu0 %v44
    %v534 = vpop.f32.mrf.mxu0
    %v535 = vadd.f32 %v470, %v534
    %536 = vmatmul.f32.gmra.mxu0 %v47
    %v537 = vpop.f32.mrf.mxu0
    %v538 = vadd.f32 %v473, %v537
    %539 = vmatmul.f32.gmra.mxu0 %v50
    %v540 = vpop.f32.mrf.mxu0
    %v541 = vadd.f32 %v476, %v540
    %542 = vmatmul.f32.gmra.mxu0 %v53
    %v543 = vpop.f32.mrf.mxu0
    %v544 = vadd.f32 %v479, %v543
    %545 = vmatmul.f32.gmra.mxu0 %v56
    %v546 = vpop.f32.mrf.mxu0
    %v547 = vadd.f32 %v482, %v546
    %548 = vmatmul.f32.gmra.mxu0 %v59
    %v549 = vpop.f32.mrf.mxu0
    %v550 = vadd.f32 %v485, %v549
    %551 = vmatmul.f32.gmra.mxu0 %v62
    %v552 = vpop.f32.mrf.mxu0
    %v553 = vadd.f32 %v488, %v552
    %554 = vmatmul.f32.gmra.mxu0 %v65
    %v555 = vpop.f32.mrf.mxu0
    %v556 = vadd.f32 %v491, %v555
    %557 = vmatmul.f32.gmra.mxu0 %v68
    %v558 = vpop.f32.mrf.mxu0
    %v559 = vadd.f32 %v494, %v558
    %560 = vmatmul.f32.gmra.mxu0 %v71
    %v561 = vpop.f32.mrf.mxu0
    %v562 = vadd.f32 %v497, %v561
    %563 = vmatmul.f32.gmra.mxu0 %v74
    %v564 = vpop.f32.mrf.mxu0
    %v565 = vadd.f32 %v500, %v564
    %566 = vmatmul.f32.gmra.mxu0 %v77
    %v567 = vpop.f32.mrf.mxu0
    %v568 = vadd.f32 %v503, %v567
    %569 = vmatmul.f32.gmra.mxu0 %v80
    %v570 = vpop.f32.mrf.mxu0
    %v571 = vadd.f32 %v506, %v570
    %572 = vmatmul.f32.gmra.mxu0 %v83
    %v573 = vpop.f32.mrf.mxu0
    %v574 = vadd.f32 %v509, %v573
    %575 = vmatmul.f32.gmra.mxu0 %v86
    %v576 = vpop.f32.mrf.mxu0
    %v577 = vadd.f32 %v512, %v576
    %578 = vmatmul.f32.gmra.mxu0 %v89
    %v579 = vpop.f32.mrf.mxu0
    %v580 = vadd.f32 %v515, %v579
    %581 = vdwg.mxu0
    %v582 = vmax.f32 %v340, 0.0
    %v583 = vmax.f32 %v535, 0.0
    %v584 = vmax.f32 %v343, 0.0
    %v585 = vmax.f32 %v538, 0.0
    %v586 = vmax.f32 %v346, 0.0
    %v587 = vmax.f32 %v541, 0.0
    %v588 = vmax.f32 %v349, 0.0
    %v589 = vmax.f32 %v544, 0.0
    %v590 = vmax.f32 %v352, 0.0
    %v591 = vmax.f32 %v547, 0.0
    %v592 = vmax.f32 %v355, 0.0
    %v593 = vmax.f32 %v550, 0.0
    %v594 = vmax.f32 %v358, 0.0
    %v595 = vmax.f32 %v553, 0.0
    %v596 = vmax.f32 %v361, 0.0
    %v597 = vmax.f32 %v556, 0.0
    %v598 = vmax.f32 %v364, 0.0
    %v599 = vmax.f32 %v559, 0.0
    %v600 = vmax.f32 %v367, 0.0
    %v601 = vmax.f32 %v562, 0.0
    %v602 = vmax.f32 %v370, 0.0
    %v603 = vmax.f32 %v565, 0.0
    %v604 = vmax.f32 %v373, 0.0
    %v605 = vmax.f32 %v568, 0.0
    %v606 = vmax.f32 %v376, 0.0
    %v607 = vmax.f32 %v571, 0.0
    %v608 = vmax.f32 %v379, 0.0
    %v609 = vmax.f32 %v574, 0.0
    %v610 = vmax.f32 %v382, 0.0
    %v611 = vmax.f32 %v577, 0.0
    %v612 = vmax.f32 %v385, 0.0
    %v613 = vmax.f32 %v580, 0.0
    %v614 = vld [vmem:[%s3] sm:$0xff]
    %v615 = vld [vmem:[%s3 + $0x8] sm:$0xff]
    %v616 = vld [vmem:[%s3 + $0x10] sm:$0xff]
    %v617 = vld [vmem:[%s3 + $0x18] sm:$0xff]
    %v618 = vld [vmem:[%s3 + $0x20] sm:$0xff]
    %v619 = vld [vmem:[%s3 + $0x28] sm:$0xff]
    %v620 = vld [vmem:[%s3 + $0x30] sm:$0xff]
    %v621 = vld [vmem:[%s3 + $0x38] sm:$0xff]
    %v622 = vld [vmem:[%s3 + $0x40] sm:$0xff]
    %v623 = vld [vmem:[%s3 + $0x48] sm:$0xff]
    %v624 = vld [vmem:[%s3 + $0x50] sm:$0xff]
    %v625 = vld [vmem:[%s3 + $0x58] sm:$0xff]
    %v626 = vld [vmem:[%s3 + $0x60] sm:$0xff]
    %v627 = vld [vmem:[%s3 + $0x68] sm:$0xff]
    %v628 = vld [vmem:[%s3 + $0x70] sm:$0xff]
    %v629 = vld [vmem:[%s3 + $0x78] sm:$0xff]
    %v630 = vld [vmem:[%s3 + $0x80] sm:$0xff]
    %v631 = vld [vmem:[%s3 + $0x88] sm:$0xff]
    %v632 = vld [vmem:[%s3 + $0x90] sm:$0xff]
    %v633 = vld [vmem:[%s3 + $0x98] sm:$0xff]
    %v634 = vld [vmem:[%s3 + $0xa0] sm:$0xff]
    %v635 = vld [vmem:[%s3 + $0xa8] sm:$0xff]
    %v636 = vld [vmem:[%s3 + $0xb0] sm:$0xff]
    %v637 = vld [vmem:[%s3 + $0xb8] sm:$0xff]
    %v638 = vld [vmem:[%s3 + $0xc0] sm:$0xff]
    %v639 = vld [vmem:[%s3 + $0xc8] sm:$0xff]
    %v640 = vld [vmem:[%s3 + $0xd0] sm:$0xff]
    %v641 = vld [vmem:[%s3 + $0xd8] sm:$0xff]
    %v642 = vld [vmem:[%s3 + $0xe0] sm:$0xff]
    %v643 = vld [vmem:[%s3 + $0xe8] sm:$0xff]
    %v644 = vld [vmem:[%s3 + $0xf0] sm:$0xff]
    %v645 = vld [vmem:[%s3 + $0xf8] sm:$0xff]
    %v646 = vld [vmem:[%s4] sm:$0x1]
    %v648 = vperm.slane %v646, 0
    %650 = vmatpush.msra.mxu0 %v629
    %651 = vmatpush.msra.mxu0 %v628
    %652 = vmatpush.msra.mxu0 %v627
    %653 = vmatpush.msra.mxu0 %v626
    %654 = vmatpush.msra.mxu0 %v625
    %655 = vmatpush.msra.mxu0 %v624
    %656 = vmatpush.msra.mxu0 %v623
    %657 = vmatpush.msra.mxu0 %v622
    %658 = vmatpush.msra.mxu0 %v621
    %659 = vmatpush.msra.mxu0 %v620
    %660 = vmatpush.msra.mxu0 %v619
    %661 = vmatpush.msra.mxu0 %v618
    %662 = vmatpush.msra.mxu0 %v617
    %663 = vmatpush.msra.mxu0 %v616
    %664 = vmatpush.msra.mxu0 %v615
    %665 = vmatpush.msra.mxu0 %v614
    %666 = vmatmul.f32.gmra.mxu0 %v582
    %v667 = vpop.f32.mrf.mxu0
    %v668 = vadd.f32 %v648, %v667
    %669 = vmatmul.f32.gmra.mxu0 %v584
    %v670 = vpop.f32.mrf.mxu0
    %v671 = vadd.f32 %v648, %v670
    %672 = vmatmul.f32.gmra.mxu0 %v586
    %v673 = vpop.f32.mrf.mxu0
    %v674 = vadd.f32 %v648, %v673
    %675 = vmatmul.f32.gmra.mxu0 %v588
    %v676 = vpop.f32.mrf.mxu0
    %v677 = vadd.f32 %v648, %v676
    %678 = vmatmul.f32.gmra.mxu0 %v590
    %v679 = vpop.f32.mrf.mxu0
    %v680 = vadd.f32 %v648, %v679
    %681 = vmatmul.f32.gmra.mxu0 %v592
    %v682 = vpop.f32.mrf.mxu0
    %v683 = vadd.f32 %v648, %v682
    %684 = vmatmul.f32.gmra.mxu0 %v594
    %v685 = vpop.f32.mrf.mxu0
    %v686 = vadd.f32 %v648, %v685
    %687 = vmatmul.f32.gmra.mxu0 %v596
    %v688 = vpop.f32.mrf.mxu0
    %v689 = vadd.f32 %v648, %v688
    %690 = vmatmul.f32.gmra.mxu0 %v598
    %v691 = vpop.f32.mrf.mxu0
    %v692 = vadd.f32 %v648, %v691
    %693 = vmatmul.f32.gmra.mxu0 %v600
    %v694 = vpop.f32.mrf.mxu0
    %v695 = vadd.f32 %v648, %v694
    %696 = vmatmul.f32.gmra.mxu0 %v602
    %v697 = vpop.f32.mrf.mxu0
    %v698 = vadd.f32 %v648, %v697
    %699 = vmatmul.f32.gmra.mxu0 %v604
    %v700 = vpop.f32.mrf.mxu0
    %v701 = vadd.f32 %v648, %v700
    %702 = vmatmul.f32.gmra.mxu0 %v606
    %v703 = vpop.f32.mrf.mxu0
    %v704 = vadd.f32 %v648, %v703
    %705 = vmatmul.f32.gmra.mxu0 %v608
    %v706 = vpop.f32.mrf.mxu0
    %v707 = vadd.f32 %v648, %v706
    %708 = vmatmul.f32.gmra.mxu0 %v610
    %v709 = vpop.f32.mrf.mxu0
    %v710 = vadd.f32 %v648, %v709
    %711 = vmatmul.f32.gmra.mxu0 %v612
    %v712 = vpop.f32.mrf.mxu0
    %v713 = vadd.f32 %v648, %v712
    %714 = vdwg.mxu0
    %715 = vmatpush.msra.mxu0 %v645
    %716 = vmatpush.msra.mxu0 %v644
    %717 = vmatpush.msra.mxu0 %v643
    %718 = vmatpush.msra.mxu0 %v642
    %719 = vmatpush.msra.mxu0 %v641
    %720 = vmatpush.msra.mxu0 %v640
    %721 = vmatpush.msra.mxu0 %v639
    %722 = vmatpush.msra.mxu0 %v638
    %723 = vmatpush.msra.mxu0 %v637
    %724 = vmatpush.msra.mxu0 %v636
    %725 = vmatpush.msra.mxu0 %v635
    %726 = vmatpush.msra.mxu0 %v634
    %727 = vmatpush.msra.mxu0 %v633
    %728 = vmatpush.msra.mxu0 %v632
    %729 = vmatpush.msra.mxu0 %v631
    %730 = vmatpush.msra.mxu0 %v630
    %731 = vmatmul.f32.gmra.mxu0 %v583
    %v732 = vpop.f32.mrf.mxu0
    %v733 = vadd.f32 %v668, %v732
    %734 = vmatmul.f32.gmra.mxu0 %v585
    %v735 = vpop.f32.mrf.mxu0
    %v736 = vadd.f32 %v671, %v735
    %737 = vmatmul.f32.gmra.mxu0 %v587
    %v738 = vpop.f32.mrf.mxu0
    %v739 = vadd.f32 %v674, %v738
    %740 = vmatmul.f32.gmra.mxu0 %v589
    %v741 = vpop.f32.mrf.mxu0
    %v742 = vadd.f32 %v677, %v741
    %743 = vmatmul.f32.gmra.mxu0 %v591
    %v744 = vpop.f32.mrf.mxu0
    %v745 = vadd.f32 %v680, %v744
    %746 = vmatmul.f32.gmra.mxu0 %v593
    %v747 = vpop.f32.mrf.mxu0
    %v748 = vadd.f32 %v683, %v747
    %749 = vmatmul.f32.gmra.mxu0 %v595
    %v750 = vpop.f32.mrf.mxu0
    %v751 = vadd.f32 %v686, %v750
    %752 = vmatmul.f32.gmra.mxu0 %v597
    %v753 = vpop.f32.mrf.mxu0
    %v754 = vadd.f32 %v689, %v753
    %755 = vmatmul.f32.gmra.mxu0 %v599
    %v756 = vpop.f32.mrf.mxu0
    %v757 = vadd.f32 %v692, %v756
    %758 = vmatmul.f32.gmra.mxu0 %v601
    %v759 = vpop.f32.mrf.mxu0
    %v760 = vadd.f32 %v695, %v759
    %761 = vmatmul.f32.gmra.mxu0 %v603
    %v762 = vpop.f32.mrf.mxu0
    %v763 = vadd.f32 %v698, %v762
    %764 = vmatmul.f32.gmra.mxu0 %v605
    %v765 = vpop.f32.mrf.mxu0
    %v766 = vadd.f32 %v701, %v765
    %767 = vmatmul.f32.gmra.mxu0 %v607
    %v768 = vpop.f32.mrf.mxu0
    %v769 = vadd.f32 %v704, %v768
    %770 = vmatmul.f32.gmra.mxu0 %v609
    %v771 = vpop.f32.mrf.mxu0
    %v772 = vadd.f32 %v707, %v771
    %773 = vmatmul.f32.gmra.mxu0 %v611
    %v774 = vpop.f32.mrf.mxu0
    %v775 = vadd.f32 %v710, %v774
    %776 = vmatmul.f32.gmra.mxu0 %v613
    %v777 = vpop.f32.mrf.mxu0
    %v778 = vadd.f32 %v713, %v777
    %779 = vdwg.mxu0
    %v780 = vmax.f32 %v733, 0.0
    %v781 = vmax.f32 %v736, 0.0
    %v782 = vmax.f32 %v739, 0.0
    %v783 = vmax.f32 %v742, 0.0
    %v784 = vmax.f32 %v745, 0.0
    %v785 = vmax.f32 %v748, 0.0
    %v786 = vmax.f32 %v751, 0.0
    %v787 = vmax.f32 %v754, 0.0
    %v788 = vmax.f32 %v757, 0.0
    %v789 = vmax.f32 %v760, 0.0
    %v790 = vmax.f32 %v763, 0.0
    %v791 = vmax.f32 %v766, 0.0
    %v792 = vmax.f32 %v769, 0.0
    %v793 = vmax.f32 %v772, 0.0
    %v794 = vmax.f32 %v775, 0.0
    %v795 = vmax.f32 %v778, 0.0
    %v796 = vld [vmem:[%s5] sm:$0xff]
    %v797 = vld [vmem:[%s6] sm:$0xff]
    %799 = vset.pattern.permute.xlu0 0
    %800 = vperm.xlu0 %799, %v797
    %v801 = vpop.permute.xlu0 %800
    %803 = vmatpush.xpose.msra.mxu0 %v795
    %804 = vmatpush.xpose.msra.mxu0 %v794
    %805 = vmatpush.xpose.msra.mxu0 %v793
    %806 = vmatpush.xpose.msra.mxu0 %v792
    %807 = vmatpush.xpose.msra.mxu0 %v791
    %808 = vmatpush.xpose.msra.mxu0 %v790
    %809 = vmatpush.xpose.msra.mxu0 %v789
    %810 = vmatpush.xpose.msra.mxu0 %v788
    %811 = vmatpush.xpose.msra.mxu0 %v787
    %812 = vmatpush.xpose.msra.mxu0 %v786
    %813 = vmatpush.xpose.msra.mxu0 %v785
    %814 = vmatpush.xpose.msra.mxu0 %v784
    %815 = vmatpush.xpose.msra.mxu0 %v783
    %816 = vmatpush.xpose.msra.mxu0 %v782
    %817 = vmatpush.xpose.msra.mxu0 %v781
    %818 = vmatpush.xpose.msra.mxu0 %v780
    %819 = vmatmul.f32.gmra.mxu0 %v796
    %v820 = vpop.f32.mrf.mxu0
    %v821 = vadd.f32 %v801, %v820
    %822 = vdwg.mxu0
    %823 = vst [vmem:[%s7] sm:$0xff] %v821
    // Predicated region
    $region34: #{decoder_model_forward.1} parent=1 // pred_check
      _
    $region35: #{decoder_model_forward.1} parent=1 // pred_check_branch
      %825 = sbr.rel (0) target = $region37
    $region36: #{decoder_model_forward.1} parent=1 // pred_region
      _
    $region37: #{decoder_model_forward.1} parent=1 // pred_fallthru
      _
    // Predicated region
    $region38: #{decoder_model_forward.1} parent=1 // pred_check
      _
    $region39: #{decoder_model_forward.1} parent=1 // pred_check_branch
      %827 = sbr.rel (0) target = $region41
    $region40: #{decoder_model_forward.1} parent=1 // pred_region
      _
    $region41: #{decoder_model_forward.1} parent=1 // pred_fallthru
      _
    %828 = vsyncpa [#allocation3], 1

</llo_original>
